<compile_context>
chip_gen: v6e
topology: v6e:2x2x1
jax: 0.10.0
libtpu: 0.0.40
codegen_flags: <defaults>
</compile_context>

<pallas_src>
import jax
import jax.numpy as jnp
from jax.experimental import pallas as pl
from jax.experimental.pallas import tpu as pltpu


_FAST_PATH_WEIGHT_BYTES = 4 * 1024 * 1024   # weight <= 4 MiB -> VMEM-resident path
_MAX_TOKENS_PER_CALL = 32768                # cap SMEM ids length per pallas_call


def _round_up(x: int, m: int) -> int:
    return (x + m - 1) // m * m


def _sublane_multiple(dtype) -> int:
    """Minimum sublane multiple for a (rows, D) tile of this dtype."""
    itemsize = jnp.dtype(dtype).itemsize
    return max(8, 32 // max(itemsize, 1))   # f32 -> 8, bf16 -> 16, int8/fp8 -> 32


# ----------------------------------------------------------------------------
# Fast path: weight resident in VMEM, gather via one-hot matmul on the MXU.
# ----------------------------------------------------------------------------
def _embedding_onehot_kernel(ids_ref, w_ref, o_ref):
    """ids_ref: (TILE_N, 1) int32 VMEM; w_ref: (V, D) VMEM; o_ref: (TILE_N, D)."""
    tile_n = o_ref.shape[0]
    v = w_ref.shape[0]
    ids_col = ids_ref[...]                                        # (tile_n, 1)
    iota_v = jax.lax.broadcasted_iota(jnp.int32, (tile_n, v), 1)  # (tile_n, V)
    onehot = (iota_v == ids_col).astype(w_ref.dtype)              # exact 0/1
    o_ref[...] = jnp.dot(
        onehot, w_ref[...], preferred_element_type=jnp.float32
    ).astype(o_ref.dtype)


# ----------------------------------------------------------------------------
# Large-vocab path: weight stays in HBM; per-row DMAs land directly in o_ref.
# ----------------------------------------------------------------------------
def _embedding_dma_gather_kernel(ids_ref, nvalid_ref, w_hbm, o_ref, copy_sems):
    """One grid step gathers up to TILE_N weight rows straight into the output tile.

    ids_ref:    SMEM scalar-prefetch ref, (n_pad,) int32 token ids.
    nvalid_ref: SMEM scalar-prefetch ref, (1,) int32 real (unpadded) token count.
    w_hbm:      (V, D) weight, left in HBM (memory_space=pl.ANY).
    o_ref:      (TILE_N, D) VMEM output tile (DMA destination; no staging slab).
    copy_sems:  (TILE_N,) DMA semaphores, one per in-flight row copy.
    """
    tile_n = o_ref.shape[0]
    base = pl.program_id(0) * tile_n
    n_valid = nvalid_ref[0]

    # Phase 1: issue all valid row DMAs (HBM -> output block) back-to-back so
    # they overlap each other; the tail tile skips rows past n_valid entirely.
    @pl.loop(0, tile_n)
    def _issue(r):
        @pl.when(base + r < n_valid)
        def _():
            token = ids_ref[base + r]
            pltpu.make_async_copy(
                w_hbm.at[pl.ds(token, 1), :],
                o_ref.at[pl.ds(r, 1), :],
                copy_sems.at[r],
            ).start()

    # Phase 2: drain with descriptors that match exactly what was started
    # (same src row, same dst slice, same semaphore).
    @pl.loop(0, tile_n)
    def _drain(r):
        @pl.when(base + r < n_valid)
        def _():
            token = ids_ref[base + r]
            pltpu.make_async_copy(
                w_hbm.at[pl.ds(token, 1), :],
                o_ref.at[pl.ds(r, 1), :],
                copy_sems.at[r],
            ).wait()
    # No Phase 3: the rows are already in o_ref; the pipeline writes the dense
    # (TILE_N, D) tile back to HBM after the body returns.


# ----------------------------------------------------------------------------
# Wrapper
# ----------------------------------------------------------------------------
def _embed_chunk(ids: jax.Array, weight: jax.Array, tile_n: int,
                 use_fast_path: bool) -> jax.Array:
    """Gather `weight[ids]` for a flat int32 id vector (one pallas_call)."""
    n = int(ids.shape[0])
    v, d = weight.shape
    sub = _sublane_multiple(weight.dtype)
    # Tile size: dtype-aware multiple of the sublane packing, capped so tiny
    # inputs don't over-pad.
    tile = _round_up(min(tile_n, _round_up(max(n, 1), sub)), sub)
    n_pad = _round_up(n, tile)
    if n_pad != n:
        ids = jnp.pad(ids, (0, n_pad - n))   # pad with id 0 (a valid row)

    if use_fast_path:
        out = pl.pallas_call(
            _embedding_onehot_kernel,
            out_shape=jax.ShapeDtypeStruct((n_pad, d), weight.dtype),
            grid_spec=pltpu.PrefetchScalarGridSpec(
                num_scalar_prefetch=0,
                grid=(n_pad // tile,),
                in_specs=[
                    pl.BlockSpec((tile, 1), lambda i: (i, 0)),   # ids column
                    pl.BlockSpec((v, d), lambda i: (0, 0)),      # weight resident
                ],
                out_specs=pl.BlockSpec((tile, d), lambda i: (i, 0)),
            ),
            compiler_params=pltpu.CompilerParams(
                # Independent token tiles; TODO(synk): CORE_PARALLEL on v7x.
                dimension_semantics=("parallel",),
            ),
        )(ids.reshape(n_pad, 1), weight)
    else:
        out = pl.pallas_call(
            _embedding_dma_gather_kernel,
            out_shape=jax.ShapeDtypeStruct((n_pad, d), weight.dtype),
            grid_spec=pltpu.PrefetchScalarGridSpec(
                num_scalar_prefetch=2,   # ids + real token count -> SMEM
                grid=(n_pad // tile,),
                in_specs=[
                    pl.BlockSpec(memory_space=pl.ANY),   # weight stays in HBM
                ],
                out_specs=pl.BlockSpec((tile, d), lambda i, ids_r, n_r: (i, 0)),
                scratch_shapes=[
                    pltpu.SemaphoreType.DMA((tile,)),
                ],
            ),
            compiler_params=pltpu.CompilerParams(
                dimension_semantics=("parallel",),
            ),
        )(ids, jnp.array([n], dtype=jnp.int32), weight)

    if n_pad != n:
        out = out[:n]
    return out


def vocab_parallel_embedding(token_ids: jax.Array, weight: jax.Array, *,
                             tile_n: int = 128,
                             fast_path_weight_bytes: int = _FAST_PATH_WEIGHT_BYTES,
                             max_tokens_per_call: int = _MAX_TOKENS_PER_CALL
                             ) -> jax.Array:
    """Equivalent of VocabParallelEmbedding.forward (tp_size == 1): weight[x]."""
    orig_shape = token_ids.shape
    ids = token_ids.reshape(-1).astype(jnp.int32)
    n = int(ids.shape[0])
    v, d = weight.shape
    weight_bytes = v * d * jnp.dtype(weight.dtype).itemsize
    use_fast_path = weight_bytes <= fast_path_weight_bytes

    if n <= max_tokens_per_call:
        out = _embed_chunk(ids, weight, tile_n, use_fast_path)
    else:
        # Chunk very long sequences so the scalar-prefetched ids array stays
        # small in SMEM (1D f32/int32[N] pads to next_pow2(4N) bytes).
        chunks = [
            _embed_chunk(ids[s:s + max_tokens_per_call], weight, tile_n,
                         use_fast_path)
            for s in range(0, n, max_tokens_per_call)
        ]
        out = jnp.concatenate(chunks, axis=0)
    return out.reshape(*orig_shape, d)


if __name__ == "__main__":
    # Module __init__ shapes: weight is (num_embeddings, embedding_dim).
    num_embeddings = 256
    embedding_dim = 128

    key = jax.random.PRNGKey(0)
    k_w, k_x, k_x2 = jax.random.split(key, 3)

    # Deterministic synthetic parameter (no checkpoint load).
    weight = jax.random.normal(k_w, (num_embeddings, embedding_dim),
                               dtype=jnp.float32)

    # Case 1: batch=2, seq=8 -> fast (VMEM-resident one-hot MXU) path.
    x = jax.random.randint(k_x, (2, 8), 0, num_embeddings, dtype=jnp.int32)
    y = jax.block_until_ready(vocab_parallel_embedding(x, weight))
    assert y.shape == (2, 8, embedding_dim), y.shape
    assert y.dtype == weight.dtype
    assert jnp.allclose(y, weight[x]), "mismatch vs reference (case 1, fast path)"

    # Case 2: multi-tile grid + tail padding (n=150 -> 2 tiles of 128), fast path.
    x2 = jax.random.randint(k_x2, (3, 50), 0, num_embeddings, dtype=jnp.int32)
    y2 = jax.block_until_ready(vocab_parallel_embedding(x2, weight))
    assert y2.shape == (3, 50, embedding_dim), y2.shape
    assert jnp.allclose(y2, weight[x2]), "mismatch vs reference (case 2, fast path)"

    # Case 3: force the large-vocab DMA-gather path (direct-to-o_ref rows,
    # tail-guarded last tile) on the same shapes.
    y3 = jax.block_until_ready(
        vocab_parallel_embedding(x2, weight, fast_path_weight_bytes=0))
    assert y3.shape == (3, 50, embedding_dim), y3.shape
    assert jnp.allclose(y3, weight[x2]), "mismatch vs reference (case 3, DMA path)"

    # Case 4: bf16 weight exercises dtype-aware tile rounding on the fast path.
    weight_bf16 = weight.astype(jnp.bfloat16)
    y4 = jax.block_until_ready(vocab_parallel_embedding(x, weight_bf16))
    assert y4.dtype == jnp.bfloat16
    assert jnp.allclose(y4.astype(jnp.float32),
                        weight_bf16[x].astype(jnp.float32)), \
        "mismatch vs reference (case 4, bf16 fast path)"

    print("KERNEL_OK")
</pallas_src>

<mosaic_0001>
module attributes {stable_mosaic.version = 11 : i64} {
  func.func @_embedding_onehot_kernel(%arg0: i32, %arg1: memref<16x1xi32, #tpu.memory_space<vmem>>, %arg2: memref<256x128xf32, #tpu.memory_space<vmem>>, %arg3: memref<16x128xf32, #tpu.memory_space<vmem>>) attributes {dimension_semantics = [#tpu.dimension_semantics<parallel>], iteration_bounds = array<i64: 1>, scalar_prefetch = 0 : i64, scratch_operands = 0 : i64, tpu.core_type = #tpu.core_type<tc>, window_params = [{transform_indices = @transform_0, window_bounds = array<i64: 16, 1>}, {pipeline_mode = #tpu.pipeline_mode<synchronous>, transform_indices = @transform_1, window_bounds = array<i64: 256, 128>}, {transform_indices = @transform_2, window_bounds = array<i64: 16, 128>}]} {
    %c0 = arith.constant 0 : index
    %c0_0 = arith.constant 0 : index
    %0 = vector.load %arg1[%c0, %c0_0] : memref<16x1xi32, #tpu.memory_space<vmem>>, vector<16x1xi32>
    %1 = tpu.iota {dimensions = array<i32: 1>} : vector<16x256xi32>
    %2 = vector.broadcast %0 : vector<16x1xi32> to vector<16x256xi32>
    %3 = arith.cmpi eq, %1, %2 : vector<16x256xi32>
    %4 = arith.extui %3 : vector<16x256xi1> to vector<16x256xi32>
    %5 = arith.sitofp %4 : vector<16x256xi32> to vector<16x256xf32>
    %c0_1 = arith.constant 0 : index
    %c0_2 = arith.constant 0 : index
    %6 = vector.load %arg2[%c0_1, %c0_2] : memref<256x128xf32, #tpu.memory_space<vmem>>, vector<256x128xf32>
    %cst = arith.constant dense<0.000000e+00> : vector<16x128xf32>
    %7 = tpu.matmul %5, %6, %cst {dimension_numbers = #tpu.dot_dimension_numbers<[1], [0], [0], [1], [0, 0, 1, 1], [], []>} : vector<16x256xf32>, vector<256x128xf32>, vector<16x128xf32> -> vector<16x128xf32>
    %c0_3 = arith.constant 0 : index
    %c0_4 = arith.constant 0 : index
    %8 = vector.load %arg3[%c0_3, %c0_4] : memref<16x128xf32, #tpu.memory_space<vmem>>, vector<16x128xf32>
    tpu.vector_store %arg3[%c0_3, %c0_4], %7 {strides = array<i32>} : memref<16x128xf32, #tpu.memory_space<vmem>>, vector<16x128xf32>,
    return
  }
  func.func @transform_0(%arg0: i32) -> (i32, i32) {
    %c0_i32 = arith.constant 0 : i32
    %c0_i32_0 = arith.constant 0 : i32
    return %arg0, %c0_i32 : i32, i32
  }
  func.func @transform_1(%arg0: i32) -> (i32, i32) {
    %c0_i32 = arith.constant 0 : i32
    %c0_i32_0 = arith.constant 0 : i32
    %c0_i32_1 = arith.constant 0 : i32
    return %c0_i32, %c0_i32_0 : i32, i32
  }
  func.func @transform_2(%arg0: i32) -> (i32, i32) {
    %c0_i32 = arith.constant 0 : i32
    %c0_i32_0 = arith.constant 0 : i32
    return %arg0, %c0_i32 : i32, i32
  }
}

</mosaic_0001>

<llo_original>
// kernel: tpu_custom_call.1
$region0: #{tpu_custom_call.1}
  #allocation0 [shape = 'u32[]', space=smem, size = 0x4, offset = 0x4, fixed_abs, tag = 'smem constant byte address 0x4 - core index']
  #allocation1 [shape = 'u32[144,128]{1,0:T(1,128)}', space=vmem, size = 0x12000, scoped, tag = 'internal scratch']
  %s0 = inlined_call_operand.vmem [shape: s32[16,1], index: 0, kind: input, shape index: {}]
  %s1 = inlined_call_operand.hbm [shape: f32[256,128], index: 1, kind: input, shape index: {}]
  %s2 = inlined_call_operand.hbm [shape: f32[16,128], index: 2, kind: output, shape index: {}]
  %s3 = sld [smem:[#allocation0]]
  $region22: #{tpu_custom_call.1} parent=0
    _
  %s5 = ssub.s32 1, %s3
  %s6 = scalar_select 0, %s5, %s3
  $region1: #{tpu_custom_call.1} parent=0
    #allocation2 [shape = 'u8[131072]{0}', space=vmem, size = 0x20000, scoped, tag = 'input window, operand 1, single buffered']
    #allocation3 [shape = 's32[1]{0}', space=sflag, size = 0x4, scoped, tag = 'scoped memory for tpu_custom_call.1']
    #allocation4 [shape = 's32[1]{0}', space=sflag, size = 0x4, scoped, tag = 'scoped memory for tpu_custom_call.1']
    #allocation5 [shape = 'u8[8192]{0}', space=vmem, size = 0x2000, scoped, tag = 'output window, operand 0, single buffered']
    %7 = vsyncpa [#allocation3], 0
    %8 = vsyncpa [#allocation4], 0
    // Predicated region
    $region2: #{tpu_custom_call.1} parent=1 // pred_check
      _
    $region3: #{tpu_custom_call.1} parent=1 // pred_check_branch
      %10 = sbr.rel (0) target = $region5
    $region4: #{tpu_custom_call.1} parent=1 // pred_region
      _
    $region5: #{tpu_custom_call.1} parent=1 // pred_fallthru
      _
    // Predicated region
    $region6: #{tpu_custom_call.1} parent=1 // pred_check
      _
    $region7: #{tpu_custom_call.1} parent=1 // pred_check_branch
      %12 = sbr.rel (0) target = $region9
    $region8: #{tpu_custom_call.1} parent=1 // pred_region
      %s14 = ssub.s32 4096, 4096
      %15 = vsyncadd [#allocation3], %s14
      %s16 = sshll.u32 [#allocation2], 4
      %s17 = int_to_ptr.vmem [resolvable:$true] %s16
      %22 = dma.hbm_to_vmem [thread:$0]  %s1, 4096, %s17, [#allocation3], 128, 128, 8
    $region9: #{tpu_custom_call.1} parent=1 // pred_fallthru
      _
    // Predicated region
    $region10: #{tpu_custom_call.1} parent=1 // pred_check
      _
    $region11: #{tpu_custom_call.1} parent=1 // pred_check_branch
      %24 = sbr.rel (0) target = $region13
    $region12: #{tpu_custom_call.1} parent=1 // pred_region
      %25 = dma.done [#allocation3], 4096
    $region13: #{tpu_custom_call.1} parent=1 // pred_fallthru
      _
    %v26 = vld [vmem:[%s0] sm:$0xff]
    %v27 = vld [vmem:[%s0 + $0x8] sm:$0xff]
    %v28 = vlaneseq
    %v29 = vand.u32 %v28, 127
    %v30 = vadd.s32 %v29, 128
    %31 = vset.pattern.permute.xlu0 0
    %32 = vperm.xlu0 %31, %v26
    %v33 = vpop.permute.xlu0 %32
    %34 = vset.pattern.permute.xlu0 0
    %35 = vperm.xlu0 %34, %v27
    %v36 = vpop.permute.xlu0 %35
    %vm37 = vcmp.eq.s32.totalorder %v29, %v33
    %vm38 = vcmp.eq.s32.totalorder %v30, %v33
    %vm39 = vcmp.eq.s32.totalorder %v29, %v36
    %vm40 = vcmp.eq.s32.totalorder %v30, %v36
    %v41 = vsel %vm37, 1, 0
    %v42 = vsel %vm38, 1, 0
    %v43 = vsel %vm39, 1, 0
    %v44 = vsel %vm40, 1, 0
    %v45 = vcvt.s32.f32 %v41
    %v46 = vcvt.s32.f32 %v42
    %v47 = vcvt.s32.f32 %v43
    %v48 = vcvt.s32.f32 %v44
    %v49 = vld [vmem:[#allocation2] sm:$0xff]
    %v50 = vld [vmem:[#allocation2 + $0x8] sm:$0xff]
    %v51 = vld [vmem:[#allocation2 + $0x10] sm:$0xff]
    %v52 = vld [vmem:[#allocation2 + $0x18] sm:$0xff]
    %v53 = vld [vmem:[#allocation2 + $0x20] sm:$0xff]
    %v54 = vld [vmem:[#allocation2 + $0x28] sm:$0xff]
    %v55 = vld [vmem:[#allocation2 + $0x30] sm:$0xff]
    %v56 = vld [vmem:[#allocation2 + $0x38] sm:$0xff]
    %v57 = vld [vmem:[#allocation2 + $0x40] sm:$0xff]
    %v58 = vld [vmem:[#allocation2 + $0x48] sm:$0xff]
    %v59 = vld [vmem:[#allocation2 + $0x50] sm:$0xff]
    %v60 = vld [vmem:[#allocation2 + $0x58] sm:$0xff]
    %v61 = vld [vmem:[#allocation2 + $0x60] sm:$0xff]
    %v62 = vld [vmem:[#allocation2 + $0x68] sm:$0xff]
    %v63 = vld [vmem:[#allocation2 + $0x70] sm:$0xff]
    %v64 = vld [vmem:[#allocation2 + $0x78] sm:$0xff]
    %v65 = vld [vmem:[#allocation2 + $0x80] sm:$0xff]
    %v66 = vld [vmem:[#allocation2 + $0x88] sm:$0xff]
    %v67 = vld [vmem:[#allocation2 + $0x90] sm:$0xff]
    %v68 = vld [vmem:[#allocation2 + $0x98] sm:$0xff]
    %v69 = vld [vmem:[#allocation2 + $0xa0] sm:$0xff]
    %v70 = vld [vmem:[#allocation2 + $0xa8] sm:$0xff]
    %v71 = vld [vmem:[#allocation2 + $0xb0] sm:$0xff]
    %v72 = vld [vmem:[#allocation2 + $0xb8] sm:$0xff]
    %v73 = vld [vmem:[#allocation2 + $0xc0] sm:$0xff]
    %v74 = vld [vmem:[#allocation2 + $0xc8] sm:$0xff]
    %v75 = vld [vmem:[#allocation2 + $0xd0] sm:$0xff]
    %v76 = vld [vmem:[#allocation2 + $0xd8] sm:$0xff]
    %v77 = vld [vmem:[#allocation2 + $0xe0] sm:$0xff]
    %v78 = vld [vmem:[#allocation2 + $0xe8] sm:$0xff]
    %v79 = vld [vmem:[#allocation2 + $0xf0] sm:$0xff]
    %v80 = vld [vmem:[#allocation2 + $0xf8] sm:$0xff]
    %81 = vmatprep.subr.mxu0 0.0
    %82 = vmatpush1.msra.mxu0 %v64
    %83 = vmatprep.subr.mxu0 0.0
    %84 = vmatpush1.msra.mxu0 %v63
    %85 = vmatprep.subr.mxu0 0.0
    %86 = vmatpush1.msra.mxu0 %v62
    %87 = vmatprep.subr.mxu0 0.0
    %88 = vmatpush1.msra.mxu0 %v61
    %89 = vmatprep.subr.mxu0 0.0
    %90 = vmatpush1.msra.mxu0 %v60
    %91 = vmatprep.subr.mxu0 0.0
    %92 = vmatpush1.msra.mxu0 %v59
    %93 = vmatprep.subr.mxu0 0.0
    %94 = vmatpush1.msra.mxu0 %v58
    %95 = vmatprep.subr.mxu0 0.0
    %96 = vmatpush1.msra.mxu0 %v57
    %97 = vmatprep.subr.mxu0 0.0
    %98 = vmatpush1.msra.mxu0 %v56
    %99 = vmatprep.subr.mxu0 0.0
    %100 = vmatpush1.msra.mxu0 %v55
    %101 = vmatprep.subr.mxu0 0.0
    %102 = vmatpush1.msra.mxu0 %v54
    %103 = vmatprep.subr.mxu0 0.0
    %104 = vmatpush1.msra.mxu0 %v53
    %105 = vmatprep.subr.mxu0 0.0
    %106 = vmatpush1.msra.mxu0 %v52
    %107 = vmatprep.subr.mxu0 0.0
    %108 = vmatpush1.msra.mxu0 %v51
    %109 = vmatprep.subr.mxu0 0.0
    %110 = vmatpush1.msra.mxu0 %v50
    %111 = vmatprep.subr.mxu0 0.0
    %112 = vmatpush1.msra.mxu0 %v49
    %113 = vmatprep.subr.mxu0 0.0
    %114 = vmatpush2.msra.mxu0 %v80
    %115 = vmatprep.subr.mxu0 0.0
    %116 = vmatpush2.msra.mxu0 %v79
    %117 = vmatprep.subr.mxu0 0.0
    %118 = vmatpush2.msra.mxu0 %v78
    %119 = vmatprep.subr.mxu0 0.0
    %120 = vmatpush2.msra.mxu0 %v77
    %121 = vmatprep.subr.mxu0 0.0
    %122 = vmatpush2.msra.mxu0 %v76
    %123 = vmatprep.subr.mxu0 0.0
    %124 = vmatpush2.msra.mxu0 %v75
    %125 = vmatprep.subr.mxu0 0.0
    %126 = vmatpush2.msra.mxu0 %v74
    %127 = vmatprep.subr.mxu0 0.0
    %128 = vmatpush2.msra.mxu0 %v73
    %129 = vmatprep.subr.mxu0 0.0
    %130 = vmatpush2.msra.mxu0 %v72
    %131 = vmatprep.subr.mxu0 0.0
    %132 = vmatpush2.msra.mxu0 %v71
    %133 = vmatprep.subr.mxu0 0.0
    %134 = vmatpush2.msra.mxu0 %v70
    %135 = vmatprep.subr.mxu0 0.0
    %136 = vmatpush2.msra.mxu0 %v69
    %137 = vmatprep.subr.mxu0 0.0
    %138 = vmatpush2.msra.mxu0 %v68
    %139 = vmatprep.subr.mxu0 0.0
    %140 = vmatpush2.msra.mxu0 %v67
    %141 = vmatprep.subr.mxu0 0.0
    %142 = vmatpush2.msra.mxu0 %v66
    %143 = vmatprep.subr.mxu0 0.0
    %144 = vmatpush2.msra.mxu0 %v65
    %145 = vmatprep.mubr.f32.mxu0 %v46
    %146 = vmatmul.mubr.f32.gmra.mxu0 %v45
    %v147 = vpop.f32.mrf.mxu0
    %v148 = vadd.f32 0.0, %v147
    %v149 = vpop.f32.mrf.mxu0
    %150 = vmatprep.mubr.f32.mxu0 %v48
    %151 = vmatmul.mubr.f32.gmra.mxu0 %v47
    %v152 = vpop.f32.mrf.mxu0
    %v153 = vadd.f32 0.0, %v152
    %v154 = vpop.f32.mrf.mxu0
    %155 = vdwg.mxu0
    %156 = vst [vmem:[#allocation5] sm:$0xff] %v148
    %157 = vst [vmem:[#allocation5 + $0x8] sm:$0xff] %v153
    // Predicated region
    $region14: #{tpu_custom_call.1} parent=1 // pred_check
      _
    $region15: #{tpu_custom_call.1} parent=1 // pred_check_branch
      %159 = sbr.rel (0) target = $region17
    $region16: #{tpu_custom_call.1} parent=1 // pred_region
      %s161 = ssub.s32 256, 256
      %162 = vsyncadd [#allocation4], %s161
      %s163 = sshll.u32 [#allocation5], 4
      %s164 = int_to_ptr.vmem [resolvable:$true] %s163
      %169 = dma.vmem_to_hbm [thread:$0]  %s164, 256, %s2, [#allocation4], 128, 128, 8
    $region17: #{tpu_custom_call.1} parent=1 // pred_fallthru
      _
    // Predicated region
    $region18: #{tpu_custom_call.1} parent=1 // pred_check
      _
    $region19: #{tpu_custom_call.1} parent=1 // pred_check_branch
      %171 = sbr.rel (0) target = $region21
    $region20: #{tpu_custom_call.1} parent=1 // pred_region
      %172 = dma.done [#allocation4], 256
    $region21: #{tpu_custom_call.1} parent=1 // pred_fallthru
      _
    %173 = vsyncpa [#allocation3], 1
    %174 = vsyncpa [#allocation4], 1

</llo_original>
